<compile_context>
chip_gen: v7x
topology: tpu7x:2x2x1
jax: 0.10.0
libtpu: 0.0.40
codegen_flags: <defaults>
</compile_context>

<pallas_src>
import functools
import math
import warnings

import jax
import jax.numpy as jnp
from jax.experimental import pallas as pl
from jax.experimental.pallas import tpu as pltpu


# ----------------------------------------------------------------------------- utilities


def _round_up(v, m):
    return ((v + m - 1) // m) * m


def _sublane_multiple(dtype):
    # 8 for 4-byte, 16 for 2-byte, 32 for 1-byte dtypes (sublane packing).
    return max(8, 32 // jnp.dtype(dtype).itemsize)


def _vmem_budget():
    """(target_block_bytes, vmem_limit_bytes), generation aware.

    64 MiB-VMEM parts (v7x-class) get smaller blocks + a conservative limit; 128 MiB
    parts (v5e / v6e) get bigger blocks to amortize the ~0.35 us/step grid overhead.
    Worst-case per-step footprint is ~5-6 blocks (double-buffered in + out + relayout
    temp), which stays well under the limit in all three configurations.
    """
    vmem_cap = None
    try:
        info = pltpu.get_tpu_info()
        vmem_cap = getattr(info, "vmem_capacity_bytes", None)
    except Exception:
        vmem_cap = None
    if vmem_cap is not None and vmem_cap <= 64 * 1024 * 1024:
        return 2 * 1024 * 1024, 32 * 1024 * 1024          # v7x: 64 MiB physical VMEM
    if vmem_cap is not None and vmem_cap >= 128 * 1024 * 1024:
        return 8 * 1024 * 1024, 64 * 1024 * 1024          # v5e / v6e: 128 MiB physical
    return 4 * 1024 * 1024, 32 * 1024 * 1024              # unknown part: conservative


def _cost(nbytes):
    # Pure data movement: read everything once, write everything once.
    return pl.CostEstimate(flops=0, transcendentals=0, bytes_accessed=2 * int(nbytes))


def _coalesce(shape, dims):
    """Merge input axes that are adjacent in the input AND appear adjacently (same order)
    in the output.  Returns (coalesced_input_shape, coalesced_perm)."""
    groups = []
    for d in dims:
        if groups and d == groups[-1][-1] + 1:
            groups[-1].append(d)
        else:
            groups.append([d])
    order = sorted(range(len(groups)), key=lambda g: groups[g][0])
    new_shape = tuple(math.prod(shape[a] for a in groups[g]) for g in order)
    merged_id = {g: k for k, g in enumerate(order)}
    perm = tuple(merged_id[g] for g in range(len(groups)))
    return new_shape, perm


# ------------------------------------------------------------------------------- kernels


def _transpose_merge_kernel(x_ref, o_ref):
    # (bt, M, nt) -> (bt, nt*M): minor-2D transpose, then merge the two minor dims so the
    # HBM store is full-lane-width (last dim = nt*M, a multiple of 128 or the full dim)
    # instead of an M-wide masked vst.msk.  The relayout rides on XLU/VPU slack (the
    # kernel is HBM-bandwidth bound).
    bt, m, nt = x_ref.shape
    xt = jnp.swapaxes(x_ref[...], 1, 2)          # (bt, nt, m)
    o_ref[...] = xt.reshape(bt, nt * m)


def _transpose_plain_kernel(x_ref, o_ref):
    # (bt, M, nt) -> (bt, nt, M).  When M >= 128 this store is already lane-dense.
    # When M < 128 it is the QUARANTINED lane-sparse fallback, only used if the merged
    # kernel does not lower for a given (block, dtype) signature (see _merge_path_lowers).
    o_ref[...] = jnp.swapaxes(x_ref[...], 1, 2)


def _make_full_permute_kernel(perm):
    def kernel(x_ref, o_ref):
        o_ref[...] = jnp.transpose(x_ref[...], perm)
    return kernel


# -------------------------------------------------------- static gate for the merge path


@functools.cache
def _merge_path_lowers(b_tile, m, n_tile, dtype_name):
    """Static, per-signature gate for the lane-dense merged-store kernel.

    Mosaic's support for the minor-dim-merging reshape depends on the block shape and
    dtype.  We feature-detect it with a cached one-off AOT compile of a single-block
    call, so the fast-path decision is deterministic, made at trace time, and valid
    under jax.jit (a runtime try/except around the real call would not be: Mosaic
    lowering is deferred past tracing there).
    """
    dtype = jnp.dtype(dtype_name)
    try:
        call = pl.pallas_call(
            _transpose_merge_kernel,
            out_shape=jax.ShapeDtypeStruct((b_tile, n_tile * m), dtype),
            grid=(1,),
            in_specs=[pl.BlockSpec((b_tile, m, n_tile), lambda i: (0, 0, 0))],
            out_specs=pl.BlockSpec((b_tile, n_tile * m), lambda i: (0, 0)),
        )
        jax.jit(call).lower(
            jax.ShapeDtypeStruct((b_tile, m, n_tile), dtype)).compile()
        return True
    except Exception:
        return False


# ------------------------------------------------------------------- batched minor swap


def _plain_2d_tiled(x_b, target, vmem_limit, cost):
    """(B, M, N) -> (B, N, M) when M >= 128: the transposed store is already lane-dense
    (output minor tile is a multiple of 128 or the full dim), so no merged layout needed.
    Tiles both M and N to respect the VMEM block budget."""
    B, M, N = x_b.shape
    dt = x_b.dtype
    itemsize = dt.itemsize

    m_tile = M if M <= 512 else 512                      # full dim or a multiple of 128
    n_budget = max(128, ((target // (m_tile * itemsize)) // 128) * 128)
    n_tile = N if n_budget >= N else n_budget
    grid = (B, pl.cdiv(M, m_tile), pl.cdiv(N, n_tile))

    return pl.pallas_call(
        _transpose_plain_kernel,
        out_shape=jax.ShapeDtypeStruct((B, N, M), dt),
        grid=grid,
        in_specs=[pl.BlockSpec((1, m_tile, n_tile), lambda b, i, j: (b, i, j))],
        out_specs=pl.BlockSpec((1, n_tile, m_tile), lambda b, i, j: (b, j, i)),
        compiler_params=pltpu.CompilerParams(
            dimension_semantics=("parallel", "parallel", "parallel"),
            vmem_limit_bytes=vmem_limit),
        cost_estimate=cost,
    )(x_b)


def _batched_trailing_transpose(x_b):
    """(B, M, N) -> (B, N, M): the workhorse for every 'trailing transpose' permutation
    (NCHW<->NHWC after coalescing, plain 2-D transpose, ...)."""
    B, M, N = x_b.shape
    dt = x_b.dtype
    itemsize = dt.itemsize
    target, vmem_limit = _vmem_budget()
    sub = _sublane_multiple(dt)
    cost = _cost(x_b.nbytes)

    if M >= 128:
        # Output minor dim already lane-dense: plain tiled transpose.
        return _plain_2d_tiled(x_b, target, vmem_limit, cost)

    # ---- M < 128: lane-dense output requires the merged (N*M)-wide store. ----
    # Sublane/lane padded footprint of one (M, N) plane in VMEM (what the compiler
    # actually allocates).  Per step the merge kernel holds ~in + relayout temp + out,
    # double-buffered in/out -> one block at `target` leaves ample headroom vs the limit.
    padded_plane = _round_up(M, sub) * _round_up(N, 128) * itemsize
    fit = target // max(padded_plane, 1)

    # Guarantee >= 2 grid steps where possible so v7x's second TensorCore gets work;
    # for B == 1 with a reasonably wide N we fall through to N-tiling instead.
    use_batch_tiling = fit >= 1 and not (B == 1 and N >= 256)

    if use_batch_tiling:
        cap = pl.cdiv(B, 2) if B >= 2 else B
        b_tile = max(1, min(B, int(fit), cap))
        if b_tile >= 8:
            b_tile = (b_tile // 8) * 8            # sublane-friendly batch tiles
        grid = (pl.cdiv(B, b_tile),)

        if _merge_path_lowers(b_tile, M, N, jnp.dtype(dt).name):
            out = pl.pallas_call(
                _transpose_merge_kernel,
                out_shape=jax.ShapeDtypeStruct((B, N * M), dt),
                grid=grid,
                in_specs=[pl.BlockSpec((b_tile, M, N), lambda i: (i, 0, 0))],
                out_specs=pl.BlockSpec((b_tile, N * M), lambda i: (i, 0)),
                compiler_params=pltpu.CompilerParams(
                    dimension_semantics=("parallel",),
                    vmem_limit_bytes=vmem_limit),
                cost_estimate=cost,
            )(x_b)
            return out.reshape(B, N, M)           # contiguous view reshape, free

        warnings.warn(
            "pallas_permute: merged lane-dense store does not lower for block "
            f"(bt={b_tile}, M={M}, N={N}, {dt}); using lane-sparse transposed store.")
        return pl.pallas_call(
            _transpose_plain_kernel,
            out_shape=jax.ShapeDtypeStruct((B, N, M), dt),
            grid=grid,
            in_specs=[pl.BlockSpec((b_tile, M, N), lambda i: (i, 0, 0))],
            out_specs=pl.BlockSpec((b_tile, N, M), lambda i: (i, 0, 0)),
            compiler_params=pltpu.CompilerParams(
                dimension_semantics=("parallel",),
                vmem_limit_bytes=vmem_limit),
            cost_estimate=cost,
        )(x_b)

    # Large plane (or single batch): tile the N (lane) axis in multiples of 128, one
    # batch row per step, keeping the merged lane-dense store.
    n_tile = max(128, ((target // (_round_up(M, sub) * itemsize)) // 128) * 128)
    if N >= 256:
        n_tile = min(n_tile, max(128, ((N // 2) // 128) * 128))   # >= 2 steps for v7x
    if n_tile >= N:
        n_tile = N
    grid = (B, pl.cdiv(N, n_tile))

    if _merge_path_lowers(1, M, n_tile, jnp.dtype(dt).name):
        out = pl.pallas_call(
            _transpose_merge_kernel,
            out_shape=jax.ShapeDtypeStruct((B, N * M), dt),
            grid=grid,
            in_specs=[pl.BlockSpec((1, M, n_tile), lambda b, j: (b, 0, j))],
            out_specs=pl.BlockSpec((1, n_tile * M), lambda b, j: (b, j)),
            compiler_params=pltpu.CompilerParams(
                dimension_semantics=("parallel", "parallel"),
                vmem_limit_bytes=vmem_limit),
            cost_estimate=cost,
        )(x_b)
        return out.reshape(B, N, M)

    warnings.warn(
        "pallas_permute: merged lane-dense store does not lower for block "
        f"(1, M={M}, n_tile={n_tile}, {dt}); using lane-sparse transposed store.")
    return pl.pallas_call(
        _transpose_plain_kernel,
        out_shape=jax.ShapeDtypeStruct((B, N, M), dt),
        grid=grid,
        in_specs=[pl.BlockSpec((1, M, n_tile), lambda b, j: (b, 0, j))],
        out_specs=pl.BlockSpec((1, n_tile, M), lambda b, j: (b, j, 0)),
        compiler_params=pltpu.CompilerParams(
            dimension_semantics=("parallel", "parallel"),
            vmem_limit_bytes=vmem_limit),
        cost_estimate=cost,
    )(x_b)


# ------------------------------------------------------------------------------ fallback


def _general_permute(x_c, perm, out_c_shape, vmem_limit, cost):
    """Permutations that are not a pure trailing transpose after coalescing
    (e.g. (3,1,0,2)).  All leading-axis movement is expressed through the grid and the
    index_maps (pure DMA addressing); only the two 'kept' axes (the input minor axis and
    the input axis that becomes the output minor) are relaid out in-kernel, so the
    working set per step is one plane, not the whole array."""
    n = x_c.ndim
    S = x_c.shape
    a = perm[-1]                      # input axis that becomes the output minor axis
    keep = {a, n - 1}                 # axes kept whole inside each block
    grid_axes = tuple(ax for ax in range(n) if ax not in keep)
    pos = {ax: i for i, ax in enumerate(grid_axes)}
    grid = tuple(S[ax] for ax in grid_axes) if grid_axes else (1,)

    in_block = tuple(S[ax] if ax in keep else 1 for ax in range(n))
    out_block = tuple(out_c_shape[o] if perm[o] in keep else 1 for o in range(n))

    def in_map(*g):
        return tuple(g[pos[ax]] if ax in pos else 0 for ax in range(n))

    def out_map(*g):
        return tuple(g[pos[perm[o]]] if perm[o] in pos else 0 for o in range(n))

    # TODO(synk): further tile the kept (S[a], S[-1]) plane when it exceeds the VMEM
    # block budget, and coalesce runs of gridded leading axes into >1-sized blocks to
    # amortize the per-step overhead for very large leading extents.
    return pl.pallas_call(
        _make_full_permute_kernel(perm),
        out_shape=jax.ShapeDtypeStruct(out_c_shape, x_c.dtype),
        grid=grid,
        in_specs=[pl.BlockSpec(in_block, in_map)],
        out_specs=pl.BlockSpec(out_block, out_map),
        compiler_params=pltpu.CompilerParams(
            dimension_semantics=("parallel",) * len(grid),
            vmem_limit_bytes=vmem_limit),
        cost_estimate=cost,
    )(x_c)


# ----------------------------------------------------------------------------- public API


def pallas_permute(x, dims):
    """Equivalent of torch.permute(x, dims); the data movement is done in Pallas."""
    dims = tuple(int(d) for d in dims)
    ndim = x.ndim
    assert len(dims) == ndim and sorted(dims) == list(range(ndim)), dims
    out_shape = tuple(x.shape[d] for d in dims)

    if dims == tuple(range(ndim)):
        return x  # identity permutation: pure view, no data movement

    # Coalesce axes that move together (free contiguous reshape outside the kernel).
    S, perm = _coalesce(x.shape, dims)
    n = len(S)
    x_c = x.reshape(S)
    out_c_shape = tuple(S[a] for a in perm)

    if perm == tuple(range(n - 2)) + (n - 1, n - 2):
        # "Trailing transpose": every leading coalesced axis stays put -> flatten them
        # into one batch axis handled purely by the grid index_map; the kernel only does
        # a minor-2D transpose.  Covers NCHW<->NHWC and plain 2-D transposes.
        B = math.prod(S[:-2]) if n > 2 else 1
        M, N = S[-2], S[-1]
        y = _batched_trailing_transpose(x_c.reshape(B, M, N))   # (B, N, M)
        return y.reshape(out_shape)                              # free view reshape

    _, vmem_limit = _vmem_budget()
    y = _general_permute(x_c, perm, out_c_shape, vmem_limit, _cost(x_c.nbytes))
    return y.reshape(out_shape)


# -------------------------------------------------------------------------------- driver


if __name__ == "__main__":
    key = jax.random.PRNGKey(0)

    # NCHW input, as a PyTorch conv-style feature map would be.
    B, C, H, W = 2, 4, 16, 16
    x = jax.random.normal(key, (B, C, H, W), dtype=jnp.float32)

    dims = (0, 2, 3, 1)  # NCHW -> NHWC, same semantics as torch.permute(x, dims)
    out = jax.block_until_ready(pallas_permute(x, dims))
    ref = jnp.transpose(x, dims)
    assert out.shape == ref.shape, (out.shape, ref.shape)
    assert out.dtype == ref.dtype, (out.dtype, ref.dtype)
    assert bool(jnp.array_equal(out, ref)), "Pallas permute != jnp.transpose (NCHW->NHWC)"

    # Same permutation under jax.jit: path selection is static, so it traces cleanly.
    out_jit = jax.block_until_ready(jax.jit(lambda t: pallas_permute(t, dims))(x))
    assert bool(jnp.array_equal(out_jit, ref)), "jit path mismatch"

    # General-permutation (tiled) fallback path.
    dims2 = (3, 1, 0, 2)
    out2 = jax.block_until_ready(pallas_permute(x, dims2))
    assert bool(jnp.array_equal(out2, jnp.transpose(x, dims2))), "fallback path mismatch"

    print("KERNEL_OK")
</pallas_src>

<mosaic_0001>
module attributes {stable_mosaic.version = 11 : i64} {
  func.func @_transpose_plain_kernel(%arg0: i32, %arg1: memref<1x4x256xf32, #tpu.memory_space<vmem>>, %arg2: memref<1x256x4xf32, #tpu.memory_space<vmem>>) attributes {dimension_semantics = [#tpu.dimension_semantics<parallel>], iteration_bounds = array<i64: 2>, scalar_prefetch = 0 : i64, scratch_operands = 0 : i64, tpu.core_type = #tpu.core_type<tc>, window_params = [{transform_indices = @transform_0, window_bounds = array<i64: 1, 4, 256>}, {transform_indices = @transform_1, window_bounds = array<i64: 1, 256, 4>}]} {
    %c0 = arith.constant 0 : index
    %c0_0 = arith.constant 0 : index
    %c0_1 = arith.constant 0 : index
    %0 = vector.load %arg1[%c0, %c0_0, %c0_1] : memref<1x4x256xf32, #tpu.memory_space<vmem>>, vector<1x4x256xf32>
    %1 = tpu.transpose %0, [0, 2, 1] : vector<1x4x256xf32> -> vector<1x256x4xf32>
    %c0_2 = arith.constant 0 : index
    %c0_3 = arith.constant 0 : index
    %c0_4 = arith.constant 0 : index
    %2 = vector.load %arg2[%c0_2, %c0_3, %c0_4] : memref<1x256x4xf32, #tpu.memory_space<vmem>>, vector<1x256x4xf32>
    tpu.vector_store %arg2[%c0_2, %c0_3, %c0_4], %1 {strides = array<i32>} : memref<1x256x4xf32, #tpu.memory_space<vmem>>, vector<1x256x4xf32>,
    return
  }
  func.func @transform_0(%arg0: i32) -> (i32, i32, i32) {
    %c0_i32 = arith.constant 0 : i32
    %c0_i32_0 = arith.constant 0 : i32
    %c0_i32_1 = arith.constant 0 : i32
    return %arg0, %c0_i32, %c0_i32_0 : i32, i32, i32
  }
  func.func @transform_1(%arg0: i32) -> (i32, i32, i32) {
    %c0_i32 = arith.constant 0 : i32
    %c0_i32_0 = arith.constant 0 : i32
    %c0_i32_1 = arith.constant 0 : i32
    return %arg0, %c0_i32, %c0_i32_0 : i32, i32, i32
  }
}

</mosaic_0001>

<llo_original>
// kernel: tpu_custom_call.1
$region0: #{tpu_custom_call.1}
  #allocation0 [shape = 'u32[]', space=smem, size = 0x4, offset = 0x4, fixed_abs, tag = 'smem constant byte address 0x4 - core index']
  #allocation1 [shape = 'u32[144,128]{1,0:T(1,128)}', space=vmem, size = 0x12000, scoped, tag = 'internal scratch']
  %s0 = inlined_call_operand.hbm [shape: f32[2,4,256], index: 0, kind: input, shape index: {}]
  %s1 = inlined_call_operand.vmem [shape: f32[2,256,4], index: 1, kind: output, shape index: {}]
  %s2 = sld [smem:[#allocation0]]
  $region41: #{tpu_custom_call.1} parent=0
    _
  %s4 = ssub.s32 1, %s2
  %s5 = scalar_select 0, %s4, %s2
  $region1: #{tpu_custom_call.1} parent=0
    #allocation2 [shape = 'u8[8192]{0}', space=vmem, size = 0x2000, scoped, tag = 'input window, operand 0']
    #allocation3 [shape = 's32[2]{0}', space=sflag, size = 0x8, scoped, tag = 'scoped memory for tpu_custom_call.1']
    %6 = vsyncpa [#allocation3], 0
    %s7 = scalar_lea.sflag [#allocation3], 1
    %8 = vsyncpa %s7, 0
    loop: start=0, step=1, limit=4
    $region2: #{tpu_custom_call.1} parent=1 // loop_pre_header
      _
    $region3: #{tpu_custom_call.1} parent=1 // loop_header
      %s10 = sphi 0, %s14
      %p11 = scmp.ge.s32.totalorder %s10, 4
      %s20 = sphi 0, %s22
      %s23 = sphi 0, %s20
      %s24 = sphi 0, %s23
      %s40 = sphi 0, %s24
      %s46 = sphi 0, %s48
      %s49 = sphi 0, %s46
      %s50 = sphi 0, %s49
      %s66 = sphi 0, %s50
    $region4: #{tpu_custom_call.1} parent=1 // loop_header_branch
      %13 = sbr.rel (%p11) target = $region8
    $region5: #{tpu_custom_call.1} parent=1 // loop_body
      %s15 = ssub.s32 %s10, 1
      %s16 = ssub.s32 %s10, 2
      %s17 = sadd.s32 %s10, 1
      %s18 = ssub.s32 %s10, %s17
      %p19 = scmp.eq.s32.totalorder %s18, 0
      %s21 = sadd.s32 %s20, 1
      %s22 = scalar_select %p19, %s20, %s21
      %p25 = pneg %p19
      %p26 = scmp.eq.s32.totalorder %s10, 1
      %p27 = por %p25, %p26
      %p28 = scmp.ne.s32.totalorder %s20, %s23
      %p29 = scmp.eq.s32.totalorder %s10, 0
      %p30 = por %p28, %p29
      %p31 = scmp.ne.s32.totalorder %s20, %s23
      %p32 = scmp.eq.s32.totalorder %s15, 1
      %p33 = por %p31, %p32
      %p34 = scmp.ne.s32.totalorder %s23, %s24
      %p35 = scmp.eq.s32.totalorder %s15, 0
      %p36 = por %p34, %p35
      %p37 = scmp.ne.s32.totalorder %s23, %s24
      %p38 = scmp.eq.s32.totalorder %s16, 1
      %p39 = por %p37, %p38
      %p41 = scmp.ne.s32.totalorder %s24, %s40
      %p42 = scmp.eq.s32.totalorder %s16, 0
      %p43 = por %p41, %p42
      %s44 = ssub.s32 %s10, %s17
      %p45 = scmp.eq.s32.totalorder %s44, 0
      %s47 = sadd.s32 %s46, 1
      %s48 = scalar_select %p45, %s46, %s47
      %p51 = pneg %p45
      %p52 = scmp.eq.s32.totalorder %s10, 1
      %p53 = por %p51, %p52
      %p54 = scmp.ne.s32.totalorder %s46, %s49
      %p55 = scmp.eq.s32.totalorder %s10, 0
      %p56 = por %p54, %p55
      %p57 = scmp.ne.s32.totalorder %s46, %s49
      %p58 = scmp.eq.s32.totalorder %s15, 1
      %p59 = por %p57, %p58
      %p60 = scmp.ne.s32.totalorder %s49, %s50
      %p61 = scmp.eq.s32.totalorder %s15, 0
      %p62 = por %p60, %p61
      %p63 = scmp.ne.s32.totalorder %s49, %s50
      %p64 = scmp.eq.s32.totalorder %s16, 1
      %p65 = por %p63, %p64
      %p67 = scmp.ne.s32.totalorder %s50, %s66
      %p68 = scmp.eq.s32.totalorder %s16, 0
      %p69 = por %p67, %p68
      %p70 = scmp.le.s32.totalorder 1, %s10
      %p71 = scmp.lt.s32.totalorder %s10, 3
      %p72 = pnand %p70, %p71
      %p73 = pneg %p72
      // Predicated region
      $region9: #{tpu_custom_call.1} parent=5 // pred_check
        _
      $region10: #{tpu_custom_call.1} parent=5 // pred_check_branch
        %75 = sbr.rel (%p72) target = $region12
      $region11: #{tpu_custom_call.1} parent=5 // pred_region
        %s76 = ssub.s32 %s10, 1
      $region12: #{tpu_custom_call.1} parent=5 // pred_fallthru
        _
      %p77 = scmp.lt.s32.totalorder %s10, 2
      // Predicated region
      $region13: #{tpu_custom_call.1} parent=5 // pred_check
        %p78 = pneg %p77
      $region14: #{tpu_custom_call.1} parent=5 // pred_check_branch
        %80 = sbr.rel (%p78) target = $region16
      $region15: #{tpu_custom_call.1} parent=5 // pred_region
        // Predicated region
        $region17: #{tpu_custom_call.1} parent=15 // pred_check
          %p81 = pneg %p30
        $region18: #{tpu_custom_call.1} parent=15 // pred_check_branch
          %83 = sbr.rel (%p81) target = $region20
        $region19: #{tpu_custom_call.1} parent=15 // pred_region
          %s84 = sand.u32 %s20, 1
          %s85 = scalar_lea.sflag [#allocation3], %s84
          %s86 = sand.u32 %s20, 1
          %s87 = smul.addr %s86, 8
          %s88 = scalar_lea.vmem [#allocation2], %s87
          %s90 = ssub.s32 128, 128
          %91 = vsyncadd %s85, %s90
          %s92 = smul.addr %s10, 2
          %s93 = smul.addr %s92, 64
          %s94 = scalar_lea.hbm %s0, %s93
          %s96 = sshll.u32 %s88, 4
          %s97 = int_to_ptr.vmem [resolvable:$true] %s96
          %99 = dma.hbm_to_vmem [thread:$0]  %s94, 128, %s97, %s85
        $region20: #{tpu_custom_call.1} parent=15 // pred_fallthru
          _
      $region16: #{tpu_custom_call.1} parent=5 // pred_fallthru
        _
      %p100 = scmp.le.s32.totalorder 1, %s10
      %p101 = scmp.lt.s32.totalorder %s10, 3
      %p102 = pnand %p100, %p101
      %p103 = pneg %p102
      // Predicated region
      $region21: #{tpu_custom_call.1} parent=5 // pred_check
        _
      $region22: #{tpu_custom_call.1} parent=5 // pred_check_branch
        %105 = sbr.rel (%p102) target = $region24
      $region23: #{tpu_custom_call.1} parent=5 // pred_region
        %s106 = ssub.s32 %s10, 1
        %s107 = sand.u32 %s23, 1
        %s108 = scalar_lea.sflag [#allocation3], %s107
        %s109 = sand.u32 %s23, 1
        %s110 = smul.addr %s109, 8
        %s111 = scalar_lea.vmem [#allocation2], %s110
        // Predicated region
        $region25: #{tpu_custom_call.1} parent=23 // pred_check
          %p112 = pneg %p36
        $region26: #{tpu_custom_call.1} parent=23 // pred_check_branch
          %114 = sbr.rel (%p112) target = $region28
        $region27: #{tpu_custom_call.1} parent=23 // pred_region
          %115 = dma.done %s108, 128
        $region28: #{tpu_custom_call.1} parent=23 // pred_fallthru
          _
        %s116 = sand.u32 %s23, 1
        %s117 = scalar_lea.sflag [#allocation3], %s116
        %s118 = sand.u32 %s23, 1
        %s119 = smul.addr %s118, 8
        %s120 = scalar_lea.vmem [#allocation2], %s119
        %p121 = pneg %p36
        %p122 = pneg %p33
        %p123 = pneg %p62
        %p124 = pneg %p59
        %p125 = scmp.lt.s32.totalorder %s15, 1
        %s126 = scalar_select %p125, %s15, 1
        %s127 = smul.addr %s126, 32
        %s128 = smul.addr %s127, 8
        %s129 = scalar_lea.vmem %s1, %s128
        %p130 = scmp.lt.s32.totalorder %s15, 1
        %s131 = scalar_select %p130, %s15, 1
        %s132 = smul.addr %s131, 32
        %s133 = smul.addr %s132, 8
        %s134 = scalar_lea.vmem %s1, %s133
        %v135 = vld [vmem:[%s111] sm:$0xff]
        %v137 = vcombine.high %v135, %v135
        %139 = vxpose.xlu0.b32.start [1/16] %v135, 128
        %140 = vxpose.xlu0.b32.cont [2/16] 0.0, 128
        %141 = vxpose.xlu0.b32.cont [3/16] 0.0, 128
        %142 = vxpose.xlu0.b32.cont [4/16] 0.0, 128
        %143 = vxpose.xlu0.b32.cont [5/16] 0.0, 128
        %144 = vxpose.xlu0.b32.cont [6/16] 0.0, 128
        %145 = vxpose.xlu0.b32.cont [7/16] 0.0, 128
        %146 = vxpose.xlu0.b32.cont [8/16] 0.0, 128
        %147 = vxpose.xlu0.b32.cont [9/16] 0.0, 128
        %148 = vxpose.xlu0.b32.cont [10/16] 0.0, 128
        %149 = vxpose.xlu0.b32.cont [11/16] 0.0, 128
        %150 = vxpose.xlu0.b32.cont [12/16] 0.0, 128
        %151 = vxpose.xlu0.b32.cont [13/16] 0.0, 128
        %152 = vxpose.xlu0.b32.cont [14/16] 0.0, 128
        %153 = vxpose.xlu0.b32.cont [15/16] 0.0, 128
        %154 = vxpose.xlu0.b32.end [16/16] 0.0, 128
        %v155 = vpop.trf.xlu0
        %v156 = vpop.trf.xlu0
        %v157 = vpop.trf.xlu0
        %v158 = vpop.trf.xlu0
        %v159 = vpop.trf.xlu0
        %v160 = vpop.trf.xlu0
        %v161 = vpop.trf.xlu0
        %v162 = vpop.trf.xlu0
        %v163 = vpop.trf.xlu0
        %v164 = vpop.trf.xlu0
        %v165 = vpop.trf.xlu0
        %v166 = vpop.trf.xlu0
        %v167 = vpop.trf.xlu0
        %v168 = vpop.trf.xlu0
        %v169 = vpop.trf.xlu0
        %v170 = vpop.trf.xlu0
        %171 = vxpose.xlu0.b32.start [1/16] %v137, 128
        %172 = vxpose.xlu0.b32.cont [2/16] 0.0, 128
        %173 = vxpose.xlu0.b32.cont [3/16] 0.0, 128
        %174 = vxpose.xlu0.b32.cont [4/16] 0.0, 128
        %175 = vxpose.xlu0.b32.cont [5/16] 0.0, 128
        %176 = vxpose.xlu0.b32.cont [6/16] 0.0, 128
        %177 = vxpose.xlu0.b32.cont [7/16] 0.0, 128
        %178 = vxpose.xlu0.b32.cont [8/16] 0.0, 128
        %179 = vxpose.xlu0.b32.cont [9/16] 0.0, 128
        %180 = vxpose.xlu0.b32.cont [10/16] 0.0, 128
        %181 = vxpose.xlu0.b32.cont [11/16] 0.0, 128
        %182 = vxpose.xlu0.b32.cont [12/16] 0.0, 128
        %183 = vxpose.xlu0.b32.cont [13/16] 0.0, 128
        %184 = vxpose.xlu0.b32.cont [14/16] 0.0, 128
        %185 = vxpose.xlu0.b32.cont [15/16] 0.0, 128
        %186 = vxpose.xlu0.b32.end [16/16] 0.0, 128
        %v187 = vpop.trf.xlu0
        %v188 = vpop.trf.xlu0
        %v189 = vpop.trf.xlu0
        %v190 = vpop.trf.xlu0
        %v191 = vpop.trf.xlu0
        %v192 = vpop.trf.xlu0
        %v193 = vpop.trf.xlu0
        %v194 = vpop.trf.xlu0
        %v195 = vpop.trf.xlu0
        %v196 = vpop.trf.xlu0
        %v197 = vpop.trf.xlu0
        %v198 = vpop.trf.xlu0
        %v199 = vpop.trf.xlu0
        %v200 = vpop.trf.xlu0
        %v201 = vpop.trf.xlu0
        %v202 = vpop.trf.xlu0
        %vm203 = vcmask 31744
        %204 = vst.msk [vmem:[%s134] sm:$0xff] %vm203, %v155
        %205 = vst.msk [vmem:[%s134 + $0x8] sm:$0xff] %vm203, %v156
        %206 = vst.msk [vmem:[%s134 + $0x10] sm:$0xff] %vm203, %v157
        %207 = vst.msk [vmem:[%s134 + $0x18] sm:$0xff] %vm203, %v158
        %208 = vst.msk [vmem:[%s134 + $0x20] sm:$0xff] %vm203, %v159
        %209 = vst.msk [vmem:[%s134 + $0x28] sm:$0xff] %vm203, %v160
        %210 = vst.msk [vmem:[%s134 + $0x30] sm:$0xff] %vm203, %v161
        %211 = vst.msk [vmem:[%s134 + $0x38] sm:$0xff] %vm203, %v162
        %212 = vst.msk [vmem:[%s134 + $0x40] sm:$0xff] %vm203, %v163
        %213 = vst.msk [vmem:[%s134 + $0x48] sm:$0xff] %vm203, %v164
        %214 = vst.msk [vmem:[%s134 + $0x50] sm:$0xff] %vm203, %v165
        %215 = vst.msk [vmem:[%s134 + $0x58] sm:$0xff] %vm203, %v166
        %216 = vst.msk [vmem:[%s134 + $0x60] sm:$0xff] %vm203, %v167
        %217 = vst.msk [vmem:[%s134 + $0x68] sm:$0xff] %vm203, %v168
        %218 = vst.msk [vmem:[%s134 + $0x70] sm:$0xff] %vm203, %v169
        %219 = vst.msk [vmem:[%s134 + $0x78] sm:$0xff] %vm203, %v170
        %220 = vst.msk [vmem:[%s134 + $0x80] sm:$0xff] %vm203, %v187
        %221 = vst.msk [vmem:[%s134 + $0x88] sm:$0xff] %vm203, %v188
        %222 = vst.msk [vmem:[%s134 + $0x90] sm:$0xff] %vm203, %v189
        %223 = vst.msk [vmem:[%s134 + $0x98] sm:$0xff] %vm203, %v190
        %224 = vst.msk [vmem:[%s134 + $0xa0] sm:$0xff] %vm203, %v191
        %225 = vst.msk [vmem:[%s134 + $0xa8] sm:$0xff] %vm203, %v192
        %226 = vst.msk [vmem:[%s134 + $0xb0] sm:$0xff] %vm203, %v193
        %227 = vst.msk [vmem:[%s134 + $0xb8] sm:$0xff] %vm203, %v194
        %228 = vst.msk [vmem:[%s134 + $0xc0] sm:$0xff] %vm203, %v195
        %229 = vst.msk [vmem:[%s134 + $0xc8] sm:$0xff] %vm203, %v196
        %230 = vst.msk [vmem:[%s134 + $0xd0] sm:$0xff] %vm203, %v197
        %231 = vst.msk [vmem:[%s134 + $0xd8] sm:$0xff] %vm203, %v198
        %232 = vst.msk [vmem:[%s134 + $0xe0] sm:$0xff] %vm203, %v199
        %233 = vst.msk [vmem:[%s134 + $0xe8] sm:$0xff] %vm203, %v200
        %234 = vst.msk [vmem:[%s134 + $0xf0] sm:$0xff] %vm203, %v201
        %235 = vst.msk [vmem:[%s134 + $0xf8] sm:$0xff] %vm203, %v202
        %p236 = scmp.lt.s32.totalorder %s15, 1
        %s237 = scalar_select %p236, %s15, 1
        %s238 = smul.addr %s237, 32
        %s239 = smul.addr %s238, 8
        %s240 = scalar_lea.vmem %s1, %s239
        // Predicated region
        $region29: #{tpu_custom_call.1} parent=23 // pred_check
          %p241 = pneg %p59
        $region30: #{tpu_custom_call.1} parent=23 // pred_check_branch
          %243 = sbr.rel (%p241) target = $region32
        $region31: #{tpu_custom_call.1} parent=23 // pred_region
          _
        $region32: #{tpu_custom_call.1} parent=23 // pred_fallthru
          _
      $region24: #{tpu_custom_call.1} parent=5 // pred_fallthru
        _
      %p244 = scmp.le.s32.totalorder 2, %s10
      // Predicated region
      $region33: #{tpu_custom_call.1} parent=5 // pred_check
        %p245 = pneg %p244
      $region34: #{tpu_custom_call.1} parent=5 // pred_check_branch
        %247 = sbr.rel (%p245) target = $region36
      $region35: #{tpu_custom_call.1} parent=5 // pred_region
        %s248 = ssub.s32 %s10, 2
        // Predicated region
        $region37: #{tpu_custom_call.1} parent=35 // pred_check
          %p249 = pneg %p65
        $region38: #{tpu_custom_call.1} parent=35 // pred_check_branch
          %251 = sbr.rel (%p249) target = $region40
        $region39: #{tpu_custom_call.1} parent=35 // pred_region
          %p252 = scmp.lt.s32.totalorder %s16, 1
          %s253 = scalar_select %p252, %s16, 1
          %s254 = smul.addr %s253, 32
          %s255 = smul.addr %s254, 8
          %s256 = scalar_lea.vmem %s1, %s255
        $region40: #{tpu_custom_call.1} parent=35 // pred_fallthru
          _
      $region36: #{tpu_custom_call.1} parent=5 // pred_fallthru
        _
    $region6: #{tpu_custom_call.1} parent=1 // loop_footer
      %s14 = sadd.s32 1, %s10
    $region7: #{tpu_custom_call.1} parent=1 // loop_footer_branch
      %9 = sbr.rel target = $region3
    $region8: #{tpu_custom_call.1} parent=1 // loop_exit
      _
    %257 = vsyncpa [#allocation3], 1
    %s258 = scalar_lea.sflag [#allocation3], 1
    %259 = vsyncpa %s258, 1

</llo_original>
